<compile_context>
chip_gen: v7x
topology: tpu7x:2x2x1
jax: 0.10.0
libtpu: 0.0.40
codegen_flags: <defaults>
</compile_context>

<pallas_src>
import jax
import jax.numpy as jnp
from jax.experimental import pallas as pl
from jax.experimental.pallas import tpu as pltpu  # noqa: F401  (TPU memory spaces / params if needed)

SCALE = 2.0343017578125e-05
DROP_P = 0.3


def _attn_value_kernel(attn_ref, x_ref, o_ref):
    # attn_ref: (BH, S, S), x_ref: (BH, S, D) -- whole problem in one VMEM block.
    attn = attn_ref[...].astype(jnp.float32)
    x = x_ref[...].astype(jnp.float32)
    o = jnp.einsum("bst,btd->bsd", attn, x, preferred_element_type=jnp.float32)
    o_ref[...] = o.astype(o_ref.dtype)


def _attn_dropout_value_kernel(attn_ref, mask_ref, x_ref, o_ref):
    # mask_ref holds the inverted-dropout scale mask: keep / (1 - p) or 0.
    attn = attn_ref[...].astype(jnp.float32) * mask_ref[...].astype(jnp.float32)
    x = x_ref[...].astype(jnp.float32)
    o = jnp.einsum("bst,btd->bsd", attn, x, preferred_element_type=jnp.float32)
    o_ref[...] = o.astype(o_ref.dtype)


def precompute_attention(a):
    """softmax(A @ A^T * SCALE, axis=-1).

    `A` (mul_3) is fixed at module-init time, so this (S, S) attention matrix
    per (b, h) is a constant; compute it once in plain JAX instead of redoing
    QK^T + exp + reductions inside the kernel on every call.
    """
    scores = jnp.einsum("bhsd,bhtd->bhst", a, a,
                        preferred_element_type=jnp.float32) * SCALE
    return jax.nn.softmax(scores, axis=-1)


def sdpa_forward(attn, x, *, dropout_key=None, training=False):
    """attn: (B, H, S, S) precomputed softmax;  x: (B, H, S, D) runtime input."""
    B, H, S, S2 = attn.shape
    assert S == S2
    D = x.shape[-1]
    BH = B * H
    attn2 = attn.reshape(BH, S, S)
    x2 = x.reshape(BH, S, D)

    def full_spec(shape):
        # Single grid step: every array is one full-extent block (block shape
        # equal to the array shape satisfies the (8,128) rule).
        return pl.BlockSpec(shape, lambda i: (0,) * len(shape))

    if training:
        # Inverted dropout mask generated host/XLA-side (deterministic given
        # key); avoids TPU-only PRNG primitives so the kernel also runs under
        # interpret mode.
        keep = jax.random.bernoulli(dropout_key, 1.0 - DROP_P, (BH, S, S))
        mask = keep.astype(jnp.float32) * (1.0 / (1.0 - DROP_P))
        out = pl.pallas_call(
            _attn_dropout_value_kernel,
            out_shape=jax.ShapeDtypeStruct((BH, S, D), x.dtype),
            grid=(1,),
            in_specs=[full_spec((BH, S, S)),
                      full_spec((BH, S, S)),
                      full_spec((BH, S, D))],
            out_specs=full_spec((BH, S, D)),
        )(attn2, mask, x2)
    else:
        out = pl.pallas_call(
            _attn_value_kernel,
            out_shape=jax.ShapeDtypeStruct((BH, S, D), x.dtype),
            grid=(1,),
            in_specs=[full_spec((BH, S, S)),
                      full_spec((BH, S, D))],
            out_specs=full_spec((BH, S, D)),
        )(attn2, x2)
    return out.reshape(B, H, S, D)


if __name__ == "__main__":
    # Small shapes consistent with the module's (batch, heads, seq, head_dim)
    # layout, with D lane-dense for TPU-friendly stores.
    B, H, S, D = 2, 2, 8, 128

    key = jax.random.PRNGKey(0)
    k_a, k_x, k_drop = jax.random.split(key, 3)

    # Deterministic internal tensor playing the role of `mul_3`.
    # TODO(synk): the torch.quantization.fuse_modules chain in __init__ is not
    # runnable PyTorch; mul_3 is modeled as a fixed random tensor.
    a = jax.random.normal(k_a, (B, H, S, D), dtype=jnp.float32)
    # Runtime input x1.
    x1 = jax.random.normal(k_x, (B, H, S, D), dtype=jnp.float32)

    attn = precompute_attention(a)

    # Eval-mode pass (dropout is identity) -> verify against pure-JAX reference.
    out_eval = jax.block_until_ready(sdpa_forward(attn, x1, training=False))
    ref_eval = jnp.einsum("bhst,bhtd->bhsd", attn, x1)
    assert jnp.allclose(out_eval, ref_eval, atol=1e-5, rtol=1e-5), "eval mismatch"

    # Train-mode pass (inverted dropout, deterministic given key) -> verify too.
    out_train = jax.block_until_ready(
        sdpa_forward(attn, x1, dropout_key=k_drop, training=True))
    keep = jax.random.bernoulli(k_drop, 1.0 - DROP_P, (B * H, S, S))
    mask = (keep.astype(jnp.float32) / (1.0 - DROP_P)).reshape(B, H, S, S)
    ref_train = jnp.einsum("bhst,bhtd->bhsd", attn * mask, x1)
    assert jnp.allclose(out_train, ref_train, atol=1e-5, rtol=1e-5), "train mismatch"

    print("KERNEL_OK")
</pallas_src>

<mosaic_0001>
module attributes {stable_mosaic.version = 11 : i64} {
  func.func @_attn_value_kernel(%arg0: i32, %arg1: memref<4x8x8xf32, #tpu.memory_space<vmem>>, %arg2: memref<4x8x128xf32, #tpu.memory_space<vmem>>, %arg3: memref<4x8x128xf32, #tpu.memory_space<vmem>>) attributes {dimension_semantics = [#tpu.dimension_semantics<arbitrary>], iteration_bounds = array<i64: 1>, scalar_prefetch = 0 : i64, scratch_operands = 0 : i64, tpu.core_type = #tpu.core_type<tc>, window_params = [{pipeline_mode = #tpu.pipeline_mode<synchronous>, transform_indices = @transform_0, window_bounds = array<i64: 4, 8, 8>}, {pipeline_mode = #tpu.pipeline_mode<synchronous>, transform_indices = @transform_1, window_bounds = array<i64: 4, 8, 128>}, {pipeline_mode = #tpu.pipeline_mode<synchronous>, transform_indices = @transform_2, window_bounds = array<i64: 4, 8, 128>}]} {
    %c0 = arith.constant 0 : index
    %c0_0 = arith.constant 0 : index
    %c0_1 = arith.constant 0 : index
    %0 = vector.load %arg1[%c0, %c0_0, %c0_1] : memref<4x8x8xf32, #tpu.memory_space<vmem>>, vector<4x8x8xf32>
    %c0_2 = arith.constant 0 : index
    %c0_3 = arith.constant 0 : index
    %c0_4 = arith.constant 0 : index
    %1 = vector.load %arg2[%c0_2, %c0_3, %c0_4] : memref<4x8x128xf32, #tpu.memory_space<vmem>>, vector<4x8x128xf32>
    "tpu.trace_start"() <{level = 10 : i32, message = "bst,btd->bsd"}> : () -> ()
    %cst = arith.constant dense<0.000000e+00> : vector<4x8x128xf32>
    %2 = tpu.matmul %0, %1, %cst {dimension_numbers = #tpu.dot_dimension_numbers<[2], [1], [1], [2], [0, 0, 0, 1, 1, 2], [0], [0]>} : vector<4x8x8xf32>, vector<4x8x128xf32>, vector<4x8x128xf32> -> vector<4x8x128xf32>
    "tpu.trace_stop"() : () -> ()
    %c0_5 = arith.constant 0 : index
    %c0_6 = arith.constant 0 : index
    %c0_7 = arith.constant 0 : index
    %3 = vector.load %arg3[%c0_5, %c0_6, %c0_7] : memref<4x8x128xf32, #tpu.memory_space<vmem>>, vector<4x8x128xf32>
    tpu.vector_store %arg3[%c0_5, %c0_6, %c0_7], %2 {strides = array<i32>} : memref<4x8x128xf32, #tpu.memory_space<vmem>>, vector<4x8x128xf32>,
    return
  }
  func.func @transform_0(%arg0: i32) -> (i32, i32, i32) {
    %c0_i32 = arith.constant 0 : i32
    %c0_i32_0 = arith.constant 0 : i32
    %c0_i32_1 = arith.constant 0 : i32
    %c0_i32_2 = arith.constant 0 : i32
    return %c0_i32, %c0_i32_0, %c0_i32_1 : i32, i32, i32
  }
  func.func @transform_1(%arg0: i32) -> (i32, i32, i32) {
    %c0_i32 = arith.constant 0 : i32
    %c0_i32_0 = arith.constant 0 : i32
    %c0_i32_1 = arith.constant 0 : i32
    %c0_i32_2 = arith.constant 0 : i32
    return %c0_i32, %c0_i32_0, %c0_i32_1 : i32, i32, i32
  }
  func.func @transform_2(%arg0: i32) -> (i32, i32, i32) {
    %c0_i32 = arith.constant 0 : i32
    %c0_i32_0 = arith.constant 0 : i32
    %c0_i32_1 = arith.constant 0 : i32
    %c0_i32_2 = arith.constant 0 : i32
    return %c0_i32, %c0_i32_0, %c0_i32_1 : i32, i32, i32
  }
}

</mosaic_0001>

<llo_original>
// kernel: tpu_custom_call.1
$region0: #{tpu_custom_call.1}
  #allocation0 [shape = 'u32[]', space=smem, size = 0x4, offset = 0x4, fixed_abs, tag = 'smem constant byte address 0x4 - core index']
  #allocation1 [shape = 'u32[144,128]{1,0:T(1,128)}', space=vmem, size = 0x12000, scoped, tag = 'internal scratch']
  %s0 = inlined_call_operand.hbm [shape: f32[4,8,8], index: 0, kind: input, shape index: {}]
  %s1 = inlined_call_operand.hbm [shape: f32[4,8,128], index: 1, kind: input, shape index: {}]
  %s2 = inlined_call_operand.hbm [shape: f32[4,8,128], index: 2, kind: output, shape index: {}]
  %s3 = sld [smem:[#allocation0]]
  $region26: #{tpu_custom_call.1} parent=0
    _
  %s5 = ssub.s32 1, %s3
  %s6 = scalar_select 0, %s5, %s3
  $region1: #{tpu_custom_call.1} parent=0
    #allocation2 [shape = 'u8[16384]{0}', space=vmem, size = 0x4000, scoped, tag = 'input window, operand 0, single buffered']
    #allocation3 [shape = 's32[1]{0}', space=sflag, size = 0x4, scoped, tag = 'scoped memory for tpu_custom_call.1']
    #allocation4 [shape = 's32[1]{0}', space=sflag, size = 0x4, scoped, tag = 'scoped memory for tpu_custom_call.1']
    #allocation5 [shape = 'u8[16384]{0}', space=vmem, size = 0x4000, scoped, tag = 'input window, operand 1, single buffered']
    #allocation6 [shape = 's32[1]{0}', space=sflag, size = 0x4, scoped, tag = 'scoped memory for tpu_custom_call.1']
    #allocation7 [shape = 'u8[16384]{0}', space=vmem, size = 0x4000, scoped, tag = 'output window, operand 0, single buffered']
    %7 = vsyncpa [#allocation3], 0
    %8 = vsyncpa [#allocation6], 0
    %9 = vsyncpa [#allocation4], 0
    // Predicated region
    $region2: #{tpu_custom_call.1} parent=1 // pred_check
      _
    $region3: #{tpu_custom_call.1} parent=1 // pred_check_branch
      %11 = sbr.rel (0) target = $region5
    $region4: #{tpu_custom_call.1} parent=1 // pred_region
      %s13 = ssub.s32 512, 512
      %14 = vsyncadd [#allocation3], %s13
      %s15 = sshll.u32 [#allocation2], 4
      %s16 = int_to_ptr.vmem [resolvable:$true] %s15
      %21 = dma.hbm_to_vmem [thread:$0]  %s0, 512, %s16, [#allocation3], 128, 128, 8
    $region5: #{tpu_custom_call.1} parent=1 // pred_fallthru
      _
    // Predicated region
    $region6: #{tpu_custom_call.1} parent=1 // pred_check
      _
    $region7: #{tpu_custom_call.1} parent=1 // pred_check_branch
      %23 = sbr.rel (0) target = $region9
    $region8: #{tpu_custom_call.1} parent=1 // pred_region
      %s25 = ssub.s32 512, 512
      %26 = vsyncadd [#allocation6], %s25
      %s27 = sshll.u32 [#allocation5], 4
      %s28 = int_to_ptr.vmem [resolvable:$true] %s27
      %33 = dma.hbm_to_vmem [thread:$0]  %s1, 512, %s28, [#allocation6], 128, 128, 8
    $region9: #{tpu_custom_call.1} parent=1 // pred_fallthru
      _
    // Predicated region
    $region10: #{tpu_custom_call.1} parent=1 // pred_check
      _
    $region11: #{tpu_custom_call.1} parent=1 // pred_check_branch
      %35 = sbr.rel (0) target = $region13
    $region12: #{tpu_custom_call.1} parent=1 // pred_region
      %36 = dma.done [#allocation3], 512
    $region13: #{tpu_custom_call.1} parent=1 // pred_fallthru
      _
    // Predicated region
    $region14: #{tpu_custom_call.1} parent=1 // pred_check
      _
    $region15: #{tpu_custom_call.1} parent=1 // pred_check_branch
      %38 = sbr.rel (0) target = $region17
    $region16: #{tpu_custom_call.1} parent=1 // pred_region
      %39 = dma.done [#allocation6], 512
    $region17: #{tpu_custom_call.1} parent=1 // pred_fallthru
      _
    %v40 = vld [vmem:[#allocation2] sm:$0xff]
    %v41 = vld [vmem:[#allocation2 + $0x8] sm:$0xff]
    %v42 = vld [vmem:[#allocation2 + $0x10] sm:$0xff]
    %v43 = vld [vmem:[#allocation2 + $0x18] sm:$0xff]
    %v44 = vld [vmem:[#allocation5] sm:$0xff]
    %v45 = vld [vmem:[#allocation5 + $0x8] sm:$0xff]
    %v46 = vld [vmem:[#allocation5 + $0x10] sm:$0xff]
    %v47 = vld [vmem:[#allocation5 + $0x18] sm:$0xff]
    %vm48 = vcmask 64512
    %v50 = vsel %vm48, %v40, 0
    %52 = vmatprep.subr.mxu0 0.0
    %53 = vmatpush1.msra.mxu0 %v44
    %54 = vmatprep.subr.mxu0 0.0
    %55 = vmatpush1.msra.mxu0 0.0
    %56 = vmatprep.subr.mxu0 0.0
    %57 = vmatpush1.msra.mxu0 0.0
    %58 = vmatprep.subr.mxu0 0.0
    %59 = vmatpush1.msra.mxu0 0.0
    %60 = vmatprep.subr.mxu0 0.0
    %61 = vmatpush1.msra.mxu0 0.0
    %62 = vmatprep.subr.mxu0 0.0
    %63 = vmatpush1.msra.mxu0 0.0
    %64 = vmatprep.subr.mxu0 0.0
    %65 = vmatpush1.msra.mxu0 0.0
    %66 = vmatprep.subr.mxu0 0.0
    %67 = vmatpush1.msra.mxu0 0.0
    %68 = vmatprep.subr.mxu0 0.0
    %69 = vmatpush1.msra.mxu0 0.0
    %70 = vmatprep.subr.mxu0 0.0
    %71 = vmatpush1.msra.mxu0 0.0
    %72 = vmatprep.subr.mxu0 0.0
    %73 = vmatpush1.msra.mxu0 0.0
    %74 = vmatprep.subr.mxu0 0.0
    %75 = vmatpush1.msra.mxu0 0.0
    %76 = vmatprep.subr.mxu0 0.0
    %77 = vmatpush1.msra.mxu0 0.0
    %78 = vmatprep.subr.mxu0 0.0
    %79 = vmatpush1.msra.mxu0 0.0
    %80 = vmatprep.subr.mxu0 0.0
    %81 = vmatpush1.msra.mxu0 0.0
    %82 = vmatprep.subr.mxu0 0.0
    %83 = vmatpush1.msra.mxu0 0.0
    %84 = vmatprep.subr.mxu0 0.0
    %85 = vmatpush1.msra.mxu0 0.0
    %86 = vmatprep.subr.mxu0 0.0
    %87 = vmatpush1.msra.mxu0 0.0
    %88 = vmatprep.subr.mxu0 0.0
    %89 = vmatpush1.msra.mxu0 0.0
    %90 = vmatprep.subr.mxu0 0.0
    %91 = vmatpush1.msra.mxu0 0.0
    %92 = vmatprep.subr.mxu0 0.0
    %93 = vmatpush1.msra.mxu0 0.0
    %94 = vmatprep.subr.mxu0 0.0
    %95 = vmatpush1.msra.mxu0 0.0
    %96 = vmatprep.subr.mxu0 0.0
    %97 = vmatpush1.msra.mxu0 0.0
    %98 = vmatprep.subr.mxu0 0.0
    %99 = vmatpush1.msra.mxu0 0.0
    %100 = vmatprep.subr.mxu0 0.0
    %101 = vmatpush1.msra.mxu0 0.0
    %102 = vmatprep.subr.mxu0 0.0
    %103 = vmatpush1.msra.mxu0 0.0
    %104 = vmatprep.subr.mxu0 0.0
    %105 = vmatpush1.msra.mxu0 0.0
    %106 = vmatprep.subr.mxu0 0.0
    %107 = vmatpush1.msra.mxu0 0.0
    %108 = vmatprep.subr.mxu0 0.0
    %109 = vmatpush1.msra.mxu0 0.0
    %110 = vmatprep.subr.mxu0 0.0
    %111 = vmatpush1.msra.mxu0 0.0
    %112 = vmatprep.subr.mxu0 0.0
    %113 = vmatpush1.msra.mxu0 0.0
    %114 = vmatprep.subr.mxu0 0.0
    %115 = vmatpush1.msra.mxu0 0.0
    %116 = vmatprep.mubr.f32.mxu0 0.0
    %117 = vmatmul.mubr.f32.gmra.mrb[0].mxu0 %v50
    %v118 = vpop.f32.mrb[0].mxu0
    %v119 = vadd.f32 0.0, %v118
    %v120 = vpop.f32.mrb[0].mxu0
    %121 = vdwg.mxu0
    %v123 = vsel %vm48, %v41, 0
    %125 = vmatprep.subr.mxu0 0.0
    %126 = vmatpush1.msra.mxu0 %v45
    %127 = vmatprep.subr.mxu0 0.0
    %128 = vmatpush1.msra.mxu0 0.0
    %129 = vmatprep.subr.mxu0 0.0
    %130 = vmatpush1.msra.mxu0 0.0
    %131 = vmatprep.subr.mxu0 0.0
    %132 = vmatpush1.msra.mxu0 0.0
    %133 = vmatprep.subr.mxu0 0.0
    %134 = vmatpush1.msra.mxu0 0.0
    %135 = vmatprep.subr.mxu0 0.0
    %136 = vmatpush1.msra.mxu0 0.0
    %137 = vmatprep.subr.mxu0 0.0
    %138 = vmatpush1.msra.mxu0 0.0
    %139 = vmatprep.subr.mxu0 0.0
    %140 = vmatpush1.msra.mxu0 0.0
    %141 = vmatprep.subr.mxu0 0.0
    %142 = vmatpush1.msra.mxu0 0.0
    %143 = vmatprep.subr.mxu0 0.0
    %144 = vmatpush1.msra.mxu0 0.0
    %145 = vmatprep.subr.mxu0 0.0
    %146 = vmatpush1.msra.mxu0 0.0
    %147 = vmatprep.subr.mxu0 0.0
    %148 = vmatpush1.msra.mxu0 0.0
    %149 = vmatprep.subr.mxu0 0.0
    %150 = vmatpush1.msra.mxu0 0.0
    %151 = vmatprep.subr.mxu0 0.0
    %152 = vmatpush1.msra.mxu0 0.0
    %153 = vmatprep.subr.mxu0 0.0
    %154 = vmatpush1.msra.mxu0 0.0
    %155 = vmatprep.subr.mxu0 0.0
    %156 = vmatpush1.msra.mxu0 0.0
    %157 = vmatprep.subr.mxu0 0.0
    %158 = vmatpush1.msra.mxu0 0.0
    %159 = vmatprep.subr.mxu0 0.0
    %160 = vmatpush1.msra.mxu0 0.0
    %161 = vmatprep.subr.mxu0 0.0
    %162 = vmatpush1.msra.mxu0 0.0
    %163 = vmatprep.subr.mxu0 0.0
    %164 = vmatpush1.msra.mxu0 0.0
    %165 = vmatprep.subr.mxu0 0.0
    %166 = vmatpush1.msra.mxu0 0.0
    %167 = vmatprep.subr.mxu0 0.0
    %168 = vmatpush1.msra.mxu0 0.0
    %169 = vmatprep.subr.mxu0 0.0
    %170 = vmatpush1.msra.mxu0 0.0
    %171 = vmatprep.subr.mxu0 0.0
    %172 = vmatpush1.msra.mxu0 0.0
    %173 = vmatprep.subr.mxu0 0.0
    %174 = vmatpush1.msra.mxu0 0.0
    %175 = vmatprep.subr.mxu0 0.0
    %176 = vmatpush1.msra.mxu0 0.0
    %177 = vmatprep.subr.mxu0 0.0
    %178 = vmatpush1.msra.mxu0 0.0
    %179 = vmatprep.subr.mxu0 0.0
    %180 = vmatpush1.msra.mxu0 0.0
    %181 = vmatprep.subr.mxu0 0.0
    %182 = vmatpush1.msra.mxu0 0.0
    %183 = vmatprep.subr.mxu0 0.0
    %184 = vmatpush1.msra.mxu0 0.0
    %185 = vmatprep.subr.mxu0 0.0
    %186 = vmatpush1.msra.mxu0 0.0
    %187 = vmatprep.subr.mxu0 0.0
    %188 = vmatpush1.msra.mxu0 0.0
    %189 = vmatprep.mubr.f32.mxu0 0.0
    %190 = vmatmul.mubr.f32.gmra.mrb[0].mxu0 %v123
    %v191 = vpop.f32.mrb[0].mxu0
    %v192 = vadd.f32 0.0, %v191
    %v193 = vpop.f32.mrb[0].mxu0
    %194 = vdwg.mxu0
    %v196 = vsel %vm48, %v42, 0
    %198 = vmatprep.subr.mxu0 0.0
    %199 = vmatpush1.msra.mxu0 %v46
    %200 = vmatprep.subr.mxu0 0.0
    %201 = vmatpush1.msra.mxu0 0.0
    %202 = vmatprep.subr.mxu0 0.0
    %203 = vmatpush1.msra.mxu0 0.0
    %204 = vmatprep.subr.mxu0 0.0
    %205 = vmatpush1.msra.mxu0 0.0
    %206 = vmatprep.subr.mxu0 0.0
    %207 = vmatpush1.msra.mxu0 0.0
    %208 = vmatprep.subr.mxu0 0.0
    %209 = vmatpush1.msra.mxu0 0.0
    %210 = vmatprep.subr.mxu0 0.0
    %211 = vmatpush1.msra.mxu0 0.0
    %212 = vmatprep.subr.mxu0 0.0
    %213 = vmatpush1.msra.mxu0 0.0
    %214 = vmatprep.subr.mxu0 0.0
    %215 = vmatpush1.msra.mxu0 0.0
    %216 = vmatprep.subr.mxu0 0.0
    %217 = vmatpush1.msra.mxu0 0.0
    %218 = vmatprep.subr.mxu0 0.0
    %219 = vmatpush1.msra.mxu0 0.0
    %220 = vmatprep.subr.mxu0 0.0
    %221 = vmatpush1.msra.mxu0 0.0
    %222 = vmatprep.subr.mxu0 0.0
    %223 = vmatpush1.msra.mxu0 0.0
    %224 = vmatprep.subr.mxu0 0.0
    %225 = vmatpush1.msra.mxu0 0.0
    %226 = vmatprep.subr.mxu0 0.0
    %227 = vmatpush1.msra.mxu0 0.0
    %228 = vmatprep.subr.mxu0 0.0
    %229 = vmatpush1.msra.mxu0 0.0
    %230 = vmatprep.subr.mxu0 0.0
    %231 = vmatpush1.msra.mxu0 0.0
    %232 = vmatprep.subr.mxu0 0.0
    %233 = vmatpush1.msra.mxu0 0.0
    %234 = vmatprep.subr.mxu0 0.0
    %235 = vmatpush1.msra.mxu0 0.0
    %236 = vmatprep.subr.mxu0 0.0
    %237 = vmatpush1.msra.mxu0 0.0
    %238 = vmatprep.subr.mxu0 0.0
    %239 = vmatpush1.msra.mxu0 0.0
    %240 = vmatprep.subr.mxu0 0.0
    %241 = vmatpush1.msra.mxu0 0.0
    %242 = vmatprep.subr.mxu0 0.0
    %243 = vmatpush1.msra.mxu0 0.0
    %244 = vmatprep.subr.mxu0 0.0
    %245 = vmatpush1.msra.mxu0 0.0
    %246 = vmatprep.subr.mxu0 0.0
    %247 = vmatpush1.msra.mxu0 0.0
    %248 = vmatprep.subr.mxu0 0.0
    %249 = vmatpush1.msra.mxu0 0.0
    %250 = vmatprep.subr.mxu0 0.0
    %251 = vmatpush1.msra.mxu0 0.0
    %252 = vmatprep.subr.mxu0 0.0
    %253 = vmatpush1.msra.mxu0 0.0
    %254 = vmatprep.subr.mxu0 0.0
    %255 = vmatpush1.msra.mxu0 0.0
    %256 = vmatprep.subr.mxu0 0.0
    %257 = vmatpush1.msra.mxu0 0.0
    %258 = vmatprep.subr.mxu0 0.0
    %259 = vmatpush1.msra.mxu0 0.0
    %260 = vmatprep.subr.mxu0 0.0
    %261 = vmatpush1.msra.mxu0 0.0
    %262 = vmatprep.mubr.f32.mxu0 0.0
    %263 = vmatmul.mubr.f32.gmra.mrb[0].mxu0 %v196
    %v264 = vpop.f32.mrb[0].mxu0
    %v265 = vadd.f32 0.0, %v264
    %v266 = vpop.f32.mrb[0].mxu0
    %267 = vdwg.mxu0
    %v269 = vsel %vm48, %v43, 0
    %271 = vmatprep.subr.mxu0 0.0
    %272 = vmatpush1.msra.mxu0 %v47
    %273 = vmatprep.subr.mxu0 0.0
    %274 = vmatpush1.msra.mxu0 0.0
    %275 = vmatprep.subr.mxu0 0.0
    %276 = vmatpush1.msra.mxu0 0.0
    %277 = vmatprep.subr.mxu0 0.0
    %278 = vmatpush1.msra.mxu0 0.0
    %279 = vmatprep.subr.mxu0 0.0
    %280 = vmatpush1.msra.mxu0 0.0
    %281 = vmatprep.subr.mxu0 0.0
    %282 = vmatpush1.msra.mxu0 0.0
    %283 = vmatprep.subr.mxu0 0.0
    %284 = vmatpush1.msra.mxu0 0.0
    %285 = vmatprep.subr.mxu0 0.0
    %286 = vmatpush1.msra.mxu0 0.0
    %287 = vmatprep.subr.mxu0 0.0
    %288 = vmatpush1.msra.mxu0 0.0
    %289 = vmatprep.subr.mxu0 0.0
    %290 = vmatpush1.msra.mxu0 0.0
    %291 = vmatprep.subr.mxu0 0.0
    %292 = vmatpush1.msra.mxu0 0.0
    %293 = vmatprep.subr.mxu0 0.0
    %294 = vmatpush1.msra.mxu0 0.0
    %295 = vmatprep.subr.mxu0 0.0
    %296 = vmatpush1.msra.mxu0 0.0
    %297 = vmatprep.subr.mxu0 0.0
    %298 = vmatpush1.msra.mxu0 0.0
    %299 = vmatprep.subr.mxu0 0.0
    %300 = vmatpush1.msra.mxu0 0.0
    %301 = vmatprep.subr.mxu0 0.0
    %302 = vmatpush1.msra.mxu0 0.0
    %303 = vmatprep.subr.mxu0 0.0
    %304 = vmatpush1.msra.mxu0 0.0
    %305 = vmatprep.subr.mxu0 0.0
    %306 = vmatpush1.msra.mxu0 0.0
    %307 = vmatprep.subr.mxu0 0.0
    %308 = vmatpush1.msra.mxu0 0.0
    %309 = vmatprep.subr.mxu0 0.0
    %310 = vmatpush1.msra.mxu0 0.0
    %311 = vmatprep.subr.mxu0 0.0
    %312 = vmatpush1.msra.mxu0 0.0
    %313 = vmatprep.subr.mxu0 0.0
    %314 = vmatpush1.msra.mxu0 0.0
    %315 = vmatprep.subr.mxu0 0.0
    %316 = vmatpush1.msra.mxu0 0.0
    %317 = vmatprep.subr.mxu0 0.0
    %318 = vmatpush1.msra.mxu0 0.0
    %319 = vmatprep.subr.mxu0 0.0
    %320 = vmatpush1.msra.mxu0 0.0
    %321 = vmatprep.subr.mxu0 0.0
    %322 = vmatpush1.msra.mxu0 0.0
    %323 = vmatprep.subr.mxu0 0.0
    %324 = vmatpush1.msra.mxu0 0.0
    %325 = vmatprep.subr.mxu0 0.0
    %326 = vmatpush1.msra.mxu0 0.0
    %327 = vmatprep.subr.mxu0 0.0
    %328 = vmatpush1.msra.mxu0 0.0
    %329 = vmatprep.subr.mxu0 0.0
    %330 = vmatpush1.msra.mxu0 0.0
    %331 = vmatprep.subr.mxu0 0.0
    %332 = vmatpush1.msra.mxu0 0.0
    %333 = vmatprep.subr.mxu0 0.0
    %334 = vmatpush1.msra.mxu0 0.0
    %335 = vmatprep.mubr.f32.mxu0 0.0
    %336 = vmatmul.mubr.f32.gmra.mrb[0].mxu0 %v269
    %v337 = vpop.f32.mrb[0].mxu0
    %v338 = vadd.f32 0.0, %v337
    %v339 = vpop.f32.mrb[0].mxu0
    %340 = vdwg.mxu0
    %341 = vst [vmem:[#allocation7] sm:$0xff] %v119
    %342 = vst [vmem:[#allocation7 + $0x8] sm:$0xff] %v192
    %343 = vst [vmem:[#allocation7 + $0x10] sm:$0xff] %v265
    %344 = vst [vmem:[#allocation7 + $0x18] sm:$0xff] %v338
    // Predicated region
    $region18: #{tpu_custom_call.1} parent=1 // pred_check
      _
    $region19: #{tpu_custom_call.1} parent=1 // pred_check_branch
      %346 = sbr.rel (0) target = $region21
    $region20: #{tpu_custom_call.1} parent=1 // pred_region
      %s348 = ssub.s32 512, 512
      %349 = vsyncadd [#allocation4], %s348
      %s350 = sshll.u32 [#allocation7], 4
      %s351 = int_to_ptr.vmem [resolvable:$true] %s350
      %356 = dma.vmem_to_hbm [thread:$0]  %s351, 512, %s2, [#allocation4], 128, 128, 8
    $region21: #{tpu_custom_call.1} parent=1 // pred_fallthru
      _
    // Predicated region
    $region22: #{tpu_custom_call.1} parent=1 // pred_check
      _
    $region23: #{tpu_custom_call.1} parent=1 // pred_check_branch
      %358 = sbr.rel (0) target = $region25
    $region24: #{tpu_custom_call.1} parent=1 // pred_region
      %359 = dma.done [#allocation4], 512
    $region25: #{tpu_custom_call.1} parent=1 // pred_fallthru
      _
    %360 = vsyncpa [#allocation3], 1
    %361 = vsyncpa [#allocation6], 1
    %362 = vsyncpa [#allocation4], 1

</llo_original>
